<compile_context>
chip_gen: v6e
topology: v6e:2x2x1
jax: 0.10.0
libtpu: 0.0.40
codegen_flags: <defaults>
</compile_context>

<pallas_src>
import functools

import jax
import jax.numpy as jnp
from jax import lax
from jax.experimental import pallas as pl
from jax.experimental.pallas import tpu as pltpu

_ALIGN = 128   # lane-aligned start of the spike-scratch interior


def _sew_basic_block_kernel(x_ref, w1_ref, b1_ref, w2_ref, b2_ref, mask_ref,
                            out_ref, s1_ref, p_ref, *, H, W, Nb):
    """Processes Nb images per grid step.

    x_ref   : (Nb, Cin, FL)    flattened spatially-padded input, FL = (H+3)*(W+2)
    w*_ref  : (Cout, 9*Cin)    tap-major folded 3x3 weights
    b*_ref  : (Cout, 1)
    mask_ref: (1, H*Wp)        1.0 on valid output columns, 0.0 on the 2 pad cols
    out_ref : (Nb, Cout, H*Wp) valid columns correct, pad columns garbage
    s1_ref  : (Cmid, FL2)      zero-bordered spike scratch (provides conv2's
                               padding), interior starts at lane offset _ALIGN
    p_ref   : (9*Cin, H*Wp)    stacked-tap patch buffer (matmul RHS)
    """
    Wp = W + 2
    HWp = H * Wp
    Cin = x_ref.shape[1]
    Cmid = w1_ref.shape[0]
    FL2 = s1_ref.shape[1]
    P = _ALIGN

    # Zero the never-written border strips of the spike scratch once per grid
    # step; the interior is fully rewritten for every image, and doing this
    # every step (rather than a program_id==0 one-shot) stays correct when the
    # "parallel" batch axis is split across v7x's two TensorCores.
    s1_ref[:, 0:P] = jnp.zeros((Cmid, P), jnp.float32)
    s1_ref[:, P + HWp:FL2] = jnp.zeros((Cmid, FL2 - (P + HWp)), jnp.float32)

    # Loop-invariant loads, hoisted out of the per-image loop.
    w1 = w1_ref[...]
    w2 = w2_ref[...]
    b1 = b1_ref[...]
    b2 = b2_ref[...]
    mask = mask_ref[...]

    def per_image(b, carry):
        # ---- conv1: stack the 9 shifted taps, ONE (Cout, 9*Cin) matmul ------
        for k in range(9):
            dy, dx = divmod(k, 3)
            off = dy * Wp + dx
            p_ref[k * Cin:(k + 1) * Cin, :] = x_ref[b, :, off:off + HWp]
        acc1 = jnp.dot(w1, p_ref[...], preferred_element_type=jnp.float32)
        spike1 = ((acc1 + b1) >= 1.0).astype(jnp.float32) * mask
        # Lane-aligned contiguous store into the scratch interior; the masked
        # (invalid) columns land exactly on conv2's left/right zero-pad slots.
        s1_ref[:, P:P + HWp] = spike1

        # ---- conv2: taps from the zero-bordered spike scratch, ONE matmul ---
        base = P - (Wp + 1)
        for k in range(9):
            dy, dx = divmod(k, 3)
            off = base + dy * Wp + dx
            p_ref[k * Cin:(k + 1) * Cin, :] = s1_ref[:, off:off + HWp]
        acc2 = jnp.dot(w2, p_ref[...], preferred_element_type=jnp.float32)
        spike2 = ((acc2 + b2) >= 1.0).astype(jnp.float32)

        # SEW "ADD" residual, read straight from the flat padded input.
        identity = x_ref[b, :, Wp + 1:Wp + 1 + HWp]
        out_ref[b, :, :] = (spike2 + identity).astype(out_ref.dtype)
        return carry

    lax.fori_loop(0, Nb, per_image, 0, unroll=min(Nb, 2))


def _pick_block_batch(n, nb_max=16):
    """Largest divisor of n that is <= nb_max while keeping the grid length
    >= 2 (so the 'parallel' batch axis can span both v7x TensorCores)."""
    best = 1
    for cand in range(1, min(n, nb_max) + 1):
        if n % cand == 0 and n // cand >= 2:
            best = cand
    return best


def sew_basic_block(x_nchw, w1_oihw, b1, w2_oihw, b2, *, block_batch=None):
    """x_nchw: (N, C, H, W) f32; w*: (Cout, Cin, 3, 3) f32; b*: (Cout,) f32.
    Returns (N, C, H, W) f32."""
    N, C, H, W = x_nchw.shape
    Cmid = w1_oihw.shape[0]
    Cout = w2_oihw.shape[0]
    assert w1_oihw.shape[1] == C and w2_oihw.shape[1] == Cmid
    assert Cout == C, "BasicBlock without downsample requires inplanes == planes"
    assert Cmid == C, "conv2 is planes->planes, so Cmid must equal C here"

    Wp = W + 2
    HWp = H * Wp
    FL = (H + 3) * Wp          # 1 top pad row, 2 bottom rows (pad + tap slack)
    FL2 = _ALIGN + HWp + 128   # aligned interior + zero tail (>= Wp+1 lanes)

    Nb = block_batch if block_batch is not None else _pick_block_batch(N)
    assert N % Nb == 0

    # OIHW -> (Cout, 9*Cin), columns ordered tap-major to match the stacked
    # patch buffer: w_k[o, k*Cin + i] = w[o, i, ky, kx] with k = ky*3 + kx.
    w1_k = jnp.transpose(w1_oihw.reshape(Cmid, C, 9), (0, 2, 1)).reshape(Cmid, 9 * C)
    w2_k = jnp.transpose(w2_oihw.reshape(Cout, Cmid, 9), (0, 2, 1)).reshape(Cout, 9 * Cmid)

    # Spatial zero-pad then flatten rows; channels stay on the sublane side.
    # TODO(synk): in a full network the producer would emit this padded-flat
    # layout directly (and the consumer would accept it), removing this extra
    # HBM pass and the un-pad slice at the end.
    xpad = jnp.pad(x_nchw, ((0, 0), (0, 0), (1, 2), (1, 1)))   # (N, C, H+3, W+2)
    xflat = xpad.reshape(N, C, FL)

    # 1.0 on valid output columns (w < W within each padded row), 0.0 on the
    # two wrap/garbage columns.
    col = jnp.arange(HWp, dtype=jnp.int32) % Wp
    colmask = (col < W).astype(jnp.float32).reshape(1, HWp)

    kernel = functools.partial(_sew_basic_block_kernel, H=H, W=W, Nb=Nb)

    out_flat = pl.pallas_call(
        kernel,
        out_shape=jax.ShapeDtypeStruct((N, Cout, HWp), jnp.float32),
        grid_spec=pltpu.PrefetchScalarGridSpec(
            num_scalar_prefetch=0,
            grid=(N // Nb,),
            in_specs=[
                pl.BlockSpec((Nb, C, FL), lambda n: (n, 0, 0)),
                pl.BlockSpec((Cmid, 9 * C), lambda n: (0, 0)),
                pl.BlockSpec((Cmid, 1), lambda n: (0, 0)),
                pl.BlockSpec((Cout, 9 * Cmid), lambda n: (0, 0)),
                pl.BlockSpec((Cout, 1), lambda n: (0, 0)),
                pl.BlockSpec((1, HWp), lambda n: (0, 0)),
            ],
            out_specs=pl.BlockSpec((Nb, Cout, HWp), lambda n: (n, 0, 0)),
            scratch_shapes=[
                pltpu.VMEM((Cmid, FL2), jnp.float32),     # zero-bordered spikes
                pltpu.VMEM((9 * C, HWp), jnp.float32),    # stacked-tap patches
            ],
        ),
        compiler_params=pltpu.CompilerParams(
            dimension_semantics=("parallel",)),   # image blocks are independent
    )(xflat, w1_k, b1.reshape(Cmid, 1), w2_k, b2.reshape(Cout, 1), colmask)

    # Drop the 2 garbage columns per padded row; the reshape itself is free.
    return out_flat.reshape(N, Cout, H, Wp)[:, :, :, :W]


def _reference(x, w1, b1, w2, b2):
    """Pure-JAX (lax.conv) reference of the same forward pass, NCHW throughout."""
    dn = ("NCHW", "OIHW", "NCHW")
    o1 = lax.conv_general_dilated(x, w1, (1, 1), "SAME", dimension_numbers=dn)
    o1 = o1 + b1[None, :, None, None]
    s1 = (o1 >= 1.0).astype(jnp.float32)
    o2 = lax.conv_general_dilated(s1, w2, (1, 1), "SAME", dimension_numbers=dn)
    o2 = o2 + b2[None, :, None, None]
    s2 = (o2 >= 1.0).astype(jnp.float32)
    return s2 + x


if __name__ == "__main__":
    N, C, H, W = 2, 4, 16, 16
    inplanes = planes = C                      # no downsample -> inplanes == planes

    key = jax.random.PRNGKey(0)
    kx, kw1, kb1, kw2, kb2 = jax.random.split(key, 5)

    bound1 = 1.0 / (9 * inplanes) ** 0.5       # PyTorch-default-ish conv init bounds
    bound2 = 1.0 / (9 * planes) ** 0.5

    x = jax.random.normal(kx, (N, C, H, W), dtype=jnp.float32)
    w1 = jax.random.uniform(kw1, (planes, inplanes, 3, 3), jnp.float32, -bound1, bound1)
    b1 = jax.random.uniform(kb1, (planes,), jnp.float32, -bound1, bound1)
    w2 = jax.random.uniform(kw2, (planes, planes, 3, 3), jnp.float32, -bound2, bound2)
    b2 = jax.random.uniform(kb2, (planes,), jnp.float32, -bound2, bound2)

    out = jax.block_until_ready(sew_basic_block(x, w1, b1, w2, b2))
    ref = jax.block_until_ready(_reference(x, w1, b1, w2, b2))

    max_err = float(jnp.max(jnp.abs(out - ref)))
    assert out.shape == (N, C, H, W)
    assert max_err < 1e-4, f"mismatch vs reference: {max_err}"

    print("KERNEL_OK")
</pallas_src>

<mosaic_0001>
module attributes {stable_mosaic.version = 11 : i64} {
  func.func @_sew_basic_block_kernel(%arg0: i32, %arg1: memref<1x4x342xf32, #tpu.memory_space<vmem>>, %arg2: memref<4x36xf32, #tpu.memory_space<vmem>>, %arg3: memref<4x1xf32, #tpu.memory_space<vmem>>, %arg4: memref<4x36xf32, #tpu.memory_space<vmem>>, %arg5: memref<4x1xf32, #tpu.memory_space<vmem>>, %arg6: memref<1x288xf32, #tpu.memory_space<vmem>>, %arg7: memref<1x4x288xf32, #tpu.memory_space<vmem>>, %arg8: memref<4x544xf32, #tpu.memory_space<vmem>>, %arg9: memref<36x288xf32, #tpu.memory_space<vmem>>) attributes {dimension_semantics = [#tpu.dimension_semantics<parallel>], iteration_bounds = array<i64: 2>, scalar_prefetch = 0 : i64, scratch_operands = 2 : i64, tpu.core_type = #tpu.core_type<tc>, window_params = [{transform_indices = @transform_0, window_bounds = array<i64: 1, 4, 342>}, {pipeline_mode = #tpu.pipeline_mode<synchronous>, transform_indices = @transform_1, window_bounds = array<i64: 4, 36>}, {pipeline_mode = #tpu.pipeline_mode<synchronous>, transform_indices = @transform_2, window_bounds = array<i64: 4, 1>}, {pipeline_mode = #tpu.pipeline_mode<synchronous>, transform_indices = @transform_3, window_bounds = array<i64: 4, 36>}, {pipeline_mode = #tpu.pipeline_mode<synchronous>, transform_indices = @transform_4, window_bounds = array<i64: 4, 1>}, {pipeline_mode = #tpu.pipeline_mode<synchronous>, transform_indices = @transform_5, window_bounds = array<i64: 1, 288>}, {transform_indices = @transform_6, window_bounds = array<i64: 1, 4, 288>}]} {
    %cst = arith.constant 0.000000e+00 : f32
    %0 = vector.broadcast %cst : f32 to vector<4x128xf32>
    %c0 = arith.constant 0 : index
    %c0_0 = arith.constant 0 : index
    %1 = vector.load %arg8[%c0, %c0_0] : memref<4x544xf32, #tpu.memory_space<vmem>>, vector<4x128xf32>
    tpu.vector_store %arg8[%c0, %c0_0], %0 {strides = array<i32>} : memref<4x544xf32, #tpu.memory_space<vmem>>, vector<4x128xf32>,
    %cst_1 = arith.constant 0.000000e+00 : f32
    %2 = vector.broadcast %cst_1 : f32 to vector<4x128xf32>
    %c0_2 = arith.constant 0 : index
    %c416 = arith.constant 416 : index
    %3 = vector.load %arg8[%c0_2, %c416] : memref<4x544xf32, #tpu.memory_space<vmem>>, vector<4x128xf32>
    tpu.vector_store %arg8[%c0_2, %c416], %2 {strides = array<i32>} : memref<4x544xf32, #tpu.memory_space<vmem>>, vector<4x128xf32>,
    %c0_3 = arith.constant 0 : index
    %c0_4 = arith.constant 0 : index
    %4 = vector.load %arg2[%c0_3, %c0_4] : memref<4x36xf32, #tpu.memory_space<vmem>>, vector<4x36xf32>
    %c0_5 = arith.constant 0 : index
    %c0_6 = arith.constant 0 : index
    %5 = vector.load %arg4[%c0_5, %c0_6] : memref<4x36xf32, #tpu.memory_space<vmem>>, vector<4x36xf32>
    %c0_7 = arith.constant 0 : index
    %c0_8 = arith.constant 0 : index
    %6 = vector.load %arg3[%c0_7, %c0_8] : memref<4x1xf32, #tpu.memory_space<vmem>>, vector<4x1xf32>
    %c0_9 = arith.constant 0 : index
    %c0_10 = arith.constant 0 : index
    %7 = vector.load %arg5[%c0_9, %c0_10] : memref<4x1xf32, #tpu.memory_space<vmem>>, vector<4x1xf32>
    %c0_11 = arith.constant 0 : index
    %c0_12 = arith.constant 0 : index
    %8 = vector.load %arg6[%c0_11, %c0_12] : memref<1x288xf32, #tpu.memory_space<vmem>>, vector<1x288xf32>
    %c0_i32 = arith.constant 0 : i32
    %9 = arith.index_cast %c0_i32 : i32 to index
    %c0_13 = arith.constant 0 : index
    %c0_14 = arith.constant 0 : index
    %10 = vector.load %arg1[%9, %c0_13, %c0_14] : memref<1x4x342xf32, #tpu.memory_space<vmem>>, vector<1x4x288xf32>
    %11 = vector.shape_cast %10 : vector<1x4x288xf32> to vector<4x288xf32>
    %c0_15 = arith.constant 0 : index
    %c0_16 = arith.constant 0 : index
    %12 = vector.load %arg9[%c0_15, %c0_16] : memref<36x288xf32, #tpu.memory_space<vmem>>, vector<4x288xf32>
    tpu.vector_store %arg9[%c0_15, %c0_16], %11 {strides = array<i32>} : memref<36x288xf32, #tpu.memory_space<vmem>>, vector<4x288xf32>,
    %13 = arith.index_cast %c0_i32 : i32 to index
    %c0_17 = arith.constant 0 : index
    %c1 = arith.constant 1 : index
    %14 = vector.load %arg1[%13, %c0_17, %c1] : memref<1x4x342xf32, #tpu.memory_space<vmem>>, vector<1x4x288xf32>
    %15 = vector.shape_cast %14 : vector<1x4x288xf32> to vector<4x288xf32>
    %c4 = arith.constant 4 : index
    %c0_18 = arith.constant 0 : index
    %16 = vector.load %arg9[%c4, %c0_18] : memref<36x288xf32, #tpu.memory_space<vmem>>, vector<4x288xf32>
    tpu.vector_store %arg9[%c4, %c0_18], %15 {strides = array<i32>} : memref<36x288xf32, #tpu.memory_space<vmem>>, vector<4x288xf32>,
    %17 = arith.index_cast %c0_i32 : i32 to index
    %c0_19 = arith.constant 0 : index
    %c2 = arith.constant 2 : index
    %18 = vector.load %arg1[%17, %c0_19, %c2] : memref<1x4x342xf32, #tpu.memory_space<vmem>>, vector<1x4x288xf32>
    %19 = vector.shape_cast %18 : vector<1x4x288xf32> to vector<4x288xf32>
    %c8 = arith.constant 8 : index
    %c0_20 = arith.constant 0 : index
    %20 = vector.load %arg9[%c8, %c0_20] : memref<36x288xf32, #tpu.memory_space<vmem>>, vector<4x288xf32>
    tpu.vector_store %arg9[%c8, %c0_20], %19 {strides = array<i32>} : memref<36x288xf32, #tpu.memory_space<vmem>>, vector<4x288xf32>,
    %21 = arith.index_cast %c0_i32 : i32 to index
    %c0_21 = arith.constant 0 : index
    %c18 = arith.constant 18 : index
    %22 = vector.load %arg1[%21, %c0_21, %c18] : memref<1x4x342xf32, #tpu.memory_space<vmem>>, vector<1x4x288xf32>
    %23 = vector.shape_cast %22 : vector<1x4x288xf32> to vector<4x288xf32>
    %c12 = arith.constant 12 : index
    %c0_22 = arith.constant 0 : index
    %24 = vector.load %arg9[%c12, %c0_22] : memref<36x288xf32, #tpu.memory_space<vmem>>, vector<4x288xf32>
    tpu.vector_store %arg9[%c12, %c0_22], %23 {strides = array<i32>} : memref<36x288xf32, #tpu.memory_space<vmem>>, vector<4x288xf32>,
    %25 = arith.index_cast %c0_i32 : i32 to index
    %c0_23 = arith.constant 0 : index
    %c19 = arith.constant 19 : index
    %26 = vector.load %arg1[%25, %c0_23, %c19] : memref<1x4x342xf32, #tpu.memory_space<vmem>>, vector<1x4x288xf32>
    %27 = vector.shape_cast %26 : vector<1x4x288xf32> to vector<4x288xf32>
    %c16 = arith.constant 16 : index
    %c0_24 = arith.constant 0 : index
    %28 = vector.load %arg9[%c16, %c0_24] : memref<36x288xf32, #tpu.memory_space<vmem>>, vector<4x288xf32>
    tpu.vector_store %arg9[%c16, %c0_24], %27 {strides = array<i32>} : memref<36x288xf32, #tpu.memory_space<vmem>>, vector<4x288xf32>,
    %29 = arith.index_cast %c0_i32 : i32 to index
    %c0_25 = arith.constant 0 : index
    %c20 = arith.constant 20 : index
    %30 = vector.load %arg1[%29, %c0_25, %c20] : memref<1x4x342xf32, #tpu.memory_space<vmem>>, vector<1x4x288xf32>
    %31 = vector.shape_cast %30 : vector<1x4x288xf32> to vector<4x288xf32>
    %c20_26 = arith.constant 20 : index
    %c0_27 = arith.constant 0 : index
    %32 = vector.load %arg9[%c20_26, %c0_27] : memref<36x288xf32, #tpu.memory_space<vmem>>, vector<4x288xf32>
    tpu.vector_store %arg9[%c20_26, %c0_27], %31 {strides = array<i32>} : memref<36x288xf32, #tpu.memory_space<vmem>>, vector<4x288xf32>,
    %33 = arith.index_cast %c0_i32 : i32 to index
    %c0_28 = arith.constant 0 : index
    %c36 = arith.constant 36 : index
    %34 = vector.load %arg1[%33, %c0_28, %c36] : memref<1x4x342xf32, #tpu.memory_space<vmem>>, vector<1x4x288xf32>
    %35 = vector.shape_cast %34 : vector<1x4x288xf32> to vector<4x288xf32>
    %c24 = arith.constant 24 : index
    %c0_29 = arith.constant 0 : index
    %36 = vector.load %arg9[%c24, %c0_29] : memref<36x288xf32, #tpu.memory_space<vmem>>, vector<4x288xf32>
    tpu.vector_store %arg9[%c24, %c0_29], %35 {strides = array<i32>} : memref<36x288xf32, #tpu.memory_space<vmem>>, vector<4x288xf32>,
    %37 = arith.index_cast %c0_i32 : i32 to index
    %c0_30 = arith.constant 0 : index
    %c37 = arith.constant 37 : index
    %38 = vector.load %arg1[%37, %c0_30, %c37] : memref<1x4x342xf32, #tpu.memory_space<vmem>>, vector<1x4x288xf32>
    %39 = vector.shape_cast %38 : vector<1x4x288xf32> to vector<4x288xf32>
    %c28 = arith.constant 28 : index
    %c0_31 = arith.constant 0 : index
    %40 = vector.load %arg9[%c28, %c0_31] : memref<36x288xf32, #tpu.memory_space<vmem>>, vector<4x288xf32>
    tpu.vector_store %arg9[%c28, %c0_31], %39 {strides = array<i32>} : memref<36x288xf32, #tpu.memory_space<vmem>>, vector<4x288xf32>,
    %41 = arith.index_cast %c0_i32 : i32 to index
    %c0_32 = arith.constant 0 : index
    %c38 = arith.constant 38 : index
    %42 = vector.load %arg1[%41, %c0_32, %c38] : memref<1x4x342xf32, #tpu.memory_space<vmem>>, vector<1x4x288xf32>
    %43 = vector.shape_cast %42 : vector<1x4x288xf32> to vector<4x288xf32>
    %c32 = arith.constant 32 : index
    %c0_33 = arith.constant 0 : index
    %44 = vector.load %arg9[%c32, %c0_33] : memref<36x288xf32, #tpu.memory_space<vmem>>, vector<4x288xf32>
    tpu.vector_store %arg9[%c32, %c0_33], %43 {strides = array<i32>} : memref<36x288xf32, #tpu.memory_space<vmem>>, vector<4x288xf32>,
    %c0_34 = arith.constant 0 : index
    %c0_35 = arith.constant 0 : index
    %45 = vector.load %arg9[%c0_34, %c0_35] : memref<36x288xf32, #tpu.memory_space<vmem>>, vector<36x288xf32>
    %cst_36 = arith.constant dense<0.000000e+00> : vector<4x288xf32>
    %46 = tpu.matmul %4, %45, %cst_36 {dimension_numbers = #tpu.dot_dimension_numbers<[1], [0], [0], [1], [0, 0, 1, 1], [], []>} : vector<4x36xf32>, vector<36x288xf32>, vector<4x288xf32> -> vector<4x288xf32>
    %47 = vector.broadcast %6 : vector<4x1xf32> to vector<4x288xf32>
    %48 = arith.addf %46, %47 : vector<4x288xf32>
    %cst_37 = arith.constant 1.000000e+00 : f32
    %49 = vector.broadcast %cst_37 : f32 to vector<4x288xf32>
    %50 = arith.cmpf oge, %48, %49 : vector<4x288xf32>
    %51 = arith.extui %50 : vector<4x288xi1> to vector<4x288xi32>
    %52 = arith.sitofp %51 : vector<4x288xi32> to vector<4x288xf32>
    %53 = vector.broadcast %8 : vector<1x288xf32> to vector<4x288xf32>
    %54 = arith.mulf %52, %53 : vector<4x288xf32>
    %c0_38 = arith.constant 0 : index
    %c128 = arith.constant 128 : index
    %55 = vector.load %arg8[%c0_38, %c128] : memref<4x544xf32, #tpu.memory_space<vmem>>, vector<4x288xf32>
    tpu.vector_store %arg8[%c0_38, %c128], %54 {strides = array<i32>} : memref<4x544xf32, #tpu.memory_space<vmem>>, vector<4x288xf32>,
    %c0_39 = arith.constant 0 : index
    %c109 = arith.constant 109 : index
    %56 = vector.load %arg8[%c0_39, %c109] : memref<4x544xf32, #tpu.memory_space<vmem>>, vector<4x288xf32>
    %c0_40 = arith.constant 0 : index
    %c0_41 = arith.constant 0 : index
    %57 = vector.load %arg9[%c0_40, %c0_41] : memref<36x288xf32, #tpu.memory_space<vmem>>, vector<4x288xf32>
    tpu.vector_store %arg9[%c0_40, %c0_41], %56 {strides = array<i32>} : memref<36x288xf32, #tpu.memory_space<vmem>>, vector<4x288xf32>,
    %c0_42 = arith.constant 0 : index
    %c110 = arith.constant 110 : index
    %58 = vector.load %arg8[%c0_42, %c110] : memref<4x544xf32, #tpu.memory_space<vmem>>, vector<4x288xf32>
    %c4_43 = arith.constant 4 : index
    %c0_44 = arith.constant 0 : index
    %59 = vector.load %arg9[%c4_43, %c0_44] : memref<36x288xf32, #tpu.memory_space<vmem>>, vector<4x288xf32>
    tpu.vector_store %arg9[%c4_43, %c0_44], %58 {strides = array<i32>} : memref<36x288xf32, #tpu.memory_space<vmem>>, vector<4x288xf32>,
    %c0_45 = arith.constant 0 : index
    %c111 = arith.constant 111 : index
    %60 = vector.load %arg8[%c0_45, %c111] : memref<4x544xf32, #tpu.memory_space<vmem>>, vector<4x288xf32>
    %c8_46 = arith.constant 8 : index
    %c0_47 = arith.constant 0 : index
    %61 = vector.load %arg9[%c8_46, %c0_47] : memref<36x288xf32, #tpu.memory_space<vmem>>, vector<4x288xf32>
    tpu.vector_store %arg9[%c8_46, %c0_47], %60 {strides = array<i32>} : memref<36x288xf32, #tpu.memory_space<vmem>>, vector<4x288xf32>,
    %c0_48 = arith.constant 0 : index
    %c127 = arith.constant 127 : index
    %62 = vector.load %arg8[%c0_48, %c127] : memref<4x544xf32, #tpu.memory_space<vmem>>, vector<4x288xf32>
    %c12_49 = arith.constant 12 : index
    %c0_50 = arith.constant 0 : index
    %63 = vector.load %arg9[%c12_49, %c0_50] : memref<36x288xf32, #tpu.memory_space<vmem>>, vector<4x288xf32>
    tpu.vector_store %arg9[%c12_49, %c0_50], %62 {strides = array<i32>} : memref<36x288xf32, #tpu.memory_space<vmem>>, vector<4x288xf32>,
    %c0_51 = arith.constant 0 : index
    %c128_52 = arith.constant 128 : index
    %64 = vector.load %arg8[%c0_51, %c128_52] : memref<4x544xf32, #tpu.memory_space<vmem>>, vector<4x288xf32>
    %c16_53 = arith.constant 16 : index
    %c0_54 = arith.constant 0 : index
    %65 = vector.load %arg9[%c16_53, %c0_54] : memref<36x288xf32, #tpu.memory_space<vmem>>, vector<4x288xf32>
    tpu.vector_store %arg9[%c16_53, %c0_54], %64 {strides = array<i32>} : memref<36x288xf32, #tpu.memory_space<vmem>>, vector<4x288xf32>,
    %c0_55 = arith.constant 0 : index
    %c129 = arith.constant 129 : index
    %66 = vector.load %arg8[%c0_55, %c129] : memref<4x544xf32, #tpu.memory_space<vmem>>, vector<4x288xf32>
    %c20_56 = arith.constant 20 : index
    %c0_57 = arith.constant 0 : index
    %67 = vector.load %arg9[%c20_56, %c0_57] : memref<36x288xf32, #tpu.memory_space<vmem>>, vector<4x288xf32>
    tpu.vector_store %arg9[%c20_56, %c0_57], %66 {strides = array<i32>} : memref<36x288xf32, #tpu.memory_space<vmem>>, vector<4x288xf32>,
    %c0_58 = arith.constant 0 : index
    %c145 = arith.constant 145 : index
    %68 = vector.load %arg8[%c0_58, %c145] : memref<4x544xf32, #tpu.memory_space<vmem>>, vector<4x288xf32>
    %c24_59 = arith.constant 24 : index
    %c0_60 = arith.constant 0 : index
    %69 = vector.load %arg9[%c24_59, %c0_60] : memref<36x288xf32, #tpu.memory_space<vmem>>, vector<4x288xf32>
    tpu.vector_store %arg9[%c24_59, %c0_60], %68 {strides = array<i32>} : memref<36x288xf32, #tpu.memory_space<vmem>>, vector<4x288xf32>,
    %c0_61 = arith.constant 0 : index
    %c146 = arith.constant 146 : index
    %70 = vector.load %arg8[%c0_61, %c146] : memref<4x544xf32, #tpu.memory_space<vmem>>, vector<4x288xf32>
    %c28_62 = arith.constant 28 : index
    %c0_63 = arith.constant 0 : index
    %71 = vector.load %arg9[%c28_62, %c0_63] : memref<36x288xf32, #tpu.memory_space<vmem>>, vector<4x288xf32>
    tpu.vector_store %arg9[%c28_62, %c0_63], %70 {strides = array<i32>} : memref<36x288xf32, #tpu.memory_space<vmem>>, vector<4x288xf32>,
    %c0_64 = arith.constant 0 : index
    %c147 = arith.constant 147 : index
    %72 = vector.load %arg8[%c0_64, %c147] : memref<4x544xf32, #tpu.memory_space<vmem>>, vector<4x288xf32>
    %c32_65 = arith.constant 32 : index
    %c0_66 = arith.constant 0 : index
    %73 = vector.load %arg9[%c32_65, %c0_66] : memref<36x288xf32, #tpu.memory_space<vmem>>, vector<4x288xf32>
    tpu.vector_store %arg9[%c32_65, %c0_66], %72 {strides = array<i32>} : memref<36x288xf32, #tpu.memory_space<vmem>>, vector<4x288xf32>,
    %c0_67 = arith.constant 0 : index
    %c0_68 = arith.constant 0 : index
    %74 = vector.load %arg9[%c0_67, %c0_68] : memref<36x288xf32, #tpu.memory_space<vmem>>, vector<36x288xf32>
    %cst_69 = arith.constant dense<0.000000e+00> : vector<4x288xf32>
    %75 = tpu.matmul %5, %74, %cst_69 {dimension_numbers = #tpu.dot_dimension_numbers<[1], [0], [0], [1], [0, 0, 1, 1], [], []>} : vector<4x36xf32>, vector<36x288xf32>, vector<4x288xf32> -> vector<4x288xf32>
    %76 = vector.broadcast %7 : vector<4x1xf32> to vector<4x288xf32>
    %77 = arith.addf %75, %76 : vector<4x288xf32>
    %cst_70 = arith.constant 1.000000e+00 : f32
    %78 = vector.broadcast %cst_70 : f32 to vector<4x288xf32>
    %79 = arith.cmpf oge, %77, %78 : vector<4x288xf32>
    %80 = arith.extui %79 : vector<4x288xi1> to vector<4x288xi32>
    %81 = arith.sitofp %80 : vector<4x288xi32> to vector<4x288xf32>
    %82 = arith.index_cast %c0_i32 : i32 to index
    %c0_71 = arith.constant 0 : index
    %c19_72 = arith.constant 19 : index
    %83 = vector.load %arg1[%82, %c0_71, %c19_72] : memref<1x4x342xf32, #tpu.memory_space<vmem>>, vector<1x4x288xf32>
    %84 = vector.shape_cast %83 : vector<1x4x288xf32> to vector<4x288xf32>
    %85 = arith.addf %81, %84 : vector<4x288xf32>
    %86 = arith.index_cast %c0_i32 : i32 to index
    %c0_73 = arith.constant 0 : index
    %c0_74 = arith.constant 0 : index
    %87 = vector.load %arg7[%86, %c0_73, %c0_74] : memref<1x4x288xf32, #tpu.memory_space<vmem>>, vector<1x4x288xf32>
    %88 = vector.shape_cast %87 : vector<1x4x288xf32> to vector<4x288xf32>
    %89 = vector.shape_cast %85 : vector<4x288xf32> to vector<1x4x288xf32>
    tpu.vector_store %arg7[%86, %c0_73, %c0_74], %89 {strides = array<i32>} : memref<1x4x288xf32, #tpu.memory_space<vmem>>, vector<1x4x288xf32>,
    %c1_i32 = arith.constant 1 : i32
    return
  }
  func.func @transform_0(%arg0: i32) -> (i32, i32, i32) {
    %c0_i32 = arith.constant 0 : i32
    %c0_i32_0 = arith.constant 0 : i32
    %c0_i32_1 = arith.constant 0 : i32
    return %arg0, %c0_i32, %c0_i32_0 : i32, i32, i32
  }
  func.func @transform_1(%arg0: i32) -> (i32, i32) {
    %c0_i32 = arith.constant 0 : i32
    %c0_i32_0 = arith.constant 0 : i32
    %c0_i32_1 = arith.constant 0 : i32
    return %c0_i32, %c0_i32_0 : i32, i32
  }
  func.func @transform_2(%arg0: i32) -> (i32, i32) {
    %c0_i32 = arith.constant 0 : i32
    %c0_i32_0 = arith.constant 0 : i32
    %c0_i32_1 = arith.constant 0 : i32
    return %c0_i32, %c0_i32_0 : i32, i32
  }
  func.func @transform_3(%arg0: i32) -> (i32, i32) {
    %c0_i32 = arith.constant 0 : i32
    %c0_i32_0 = arith.constant 0 : i32
    %c0_i32_1 = arith.constant 0 : i32
    return %c0_i32, %c0_i32_0 : i32, i32
  }
  func.func @transform_4(%arg0: i32) -> (i32, i32) {
    %c0_i32 = arith.constant 0 : i32
    %c0_i32_0 = arith.constant 0 : i32
    %c0_i32_1 = arith.constant 0 : i32
    return %c0_i32, %c0_i32_0 : i32, i32
  }
  func.func @transform_5(%arg0: i32) -> (i32, i32) {
    %c0_i32 = arith.constant 0 : i32
    %c0_i32_0 = arith.constant 0 : i32
    %c0_i32_1 = arith.constant 0 : i32
    return %c0_i32, %c0_i32_0 : i32, i32
  }
  func.func @transform_6(%arg0: i32) -> (i32, i32, i32) {
    %c0_i32 = arith.constant 0 : i32
    %c0_i32_0 = arith.constant 0 : i32
    %c0_i32_1 = arith.constant 0 : i32
    return %arg0, %c0_i32, %c0_i32_0 : i32, i32, i32
  }
}

</mosaic_0001>

<llo_original>
// kernel: tpu_custom_call.1
$region0: #{tpu_custom_call.1}
  #allocation0 [shape = 'u32[]', space=smem, size = 0x4, offset = 0x4, fixed_abs, tag = 'smem constant byte address 0x4 - core index']
  #allocation1 [shape = 'u32[144,128]{1,0:T(1,128)}', space=vmem, size = 0x12000, scoped, tag = 'internal scratch']
  #allocation2 [shape = 'f32[4,544]{1,0:T(4,128)}', space=vmem, size = 0x2800, scoped, tag = 'scratch operand']
  #allocation3 [shape = 'f32[36,288]{1,0:T(8,128)}', space=vmem, size = 0xf000, scoped, tag = 'scratch operand']
  %s0 = inlined_call_operand.hbm [shape: f32[2,4,342], index: 0, kind: input, shape index: {}]
  %s1 = inlined_call_operand.vmem [shape: f32[4,36], index: 1, kind: input, shape index: {}]
  %s2 = inlined_call_operand.vmem [shape: f32[4,1], index: 2, kind: input, shape index: {}]
  %s3 = inlined_call_operand.vmem [shape: f32[4,36], index: 3, kind: input, shape index: {}]
  %s4 = inlined_call_operand.vmem [shape: f32[4,1], index: 4, kind: input, shape index: {}]
  %s5 = inlined_call_operand.vmem [shape: f32[1,288], index: 5, kind: input, shape index: {}]
  %s6 = inlined_call_operand.hbm [shape: f32[2,4,288], index: 6, kind: output, shape index: {}]
  %s7 = sld [smem:[#allocation0]]
  $region61: #{tpu_custom_call.1} parent=0
    _
  %s9 = ssub.s32 1, %s7
  %s10 = scalar_select 0, %s9, %s7
  $region1: #{tpu_custom_call.1} parent=0
    #allocation4 [shape = 'u8[12288]{0}', space=vmem, size = 0x3000, scoped, tag = 'input window, operand 0']
    #allocation5 [shape = 's32[2]{0}', space=sflag, size = 0x8, scoped, tag = 'scoped memory for tpu_custom_call.1']
    #allocation6 [shape = 's32[2]{0}', space=sflag, size = 0x8, scoped, tag = 'scoped memory for tpu_custom_call.1']
    #allocation7 [shape = 'u8[12288]{0}', space=vmem, size = 0x3000, scoped, tag = 'output window, operand 0']
    %11 = vsyncpa [#allocation5], 0
    %s12 = scalar_lea.sflag [#allocation5], 1
    %13 = vsyncpa %s12, 0
    %14 = vsyncpa [#allocation6], 0
    %s15 = scalar_lea.sflag [#allocation6], 1
    %16 = vsyncpa %s15, 0
    loop: start=0, step=1, limit=4
    $region2: #{tpu_custom_call.1} parent=1 // loop_pre_header
      _
    $region3: #{tpu_custom_call.1} parent=1 // loop_header
      %s18 = sphi 0, %s22
      %p19 = scmp.ge.s32.totalorder %s18, 4
      %s28 = sphi 0, %s30
      %s31 = sphi 0, %s28
      %s32 = sphi 0, %s31
      %s48 = sphi 0, %s32
      %s52 = sphi 0, %s52
      %s54 = sphi 0, %s52
      %s55 = sphi 0, %s54
      %s69 = sphi 0, %s55
      %s73 = sphi 0, %s73
      %s75 = sphi 0, %s73
      %s76 = sphi 0, %s75
      %s90 = sphi 0, %s76
      %s94 = sphi 0, %s94
      %s96 = sphi 0, %s94
      %s97 = sphi 0, %s96
      %s111 = sphi 0, %s97
      %s115 = sphi 0, %s115
      %s117 = sphi 0, %s115
      %s118 = sphi 0, %s117
      %s132 = sphi 0, %s118
      %s136 = sphi 0, %s136
      %s138 = sphi 0, %s136
      %s139 = sphi 0, %s138
      %s153 = sphi 0, %s139
      %s159 = sphi 0, %s161
      %s162 = sphi 0, %s159
      %s163 = sphi 0, %s162
      %s179 = sphi 0, %s163
    $region4: #{tpu_custom_call.1} parent=1 // loop_header_branch
      %21 = sbr.rel (%p19) target = $region8
    $region5: #{tpu_custom_call.1} parent=1 // loop_body
      %s23 = ssub.s32 %s18, 1
      %s24 = ssub.s32 %s18, 2
      %s25 = sadd.s32 %s18, 1
      %s26 = ssub.s32 %s18, %s25
      %p27 = scmp.eq.s32.totalorder %s26, 0
      %s29 = sadd.s32 %s28, 1
      %s30 = scalar_select %p27, %s28, %s29
      %p33 = pneg %p27
      %p34 = scmp.eq.s32.totalorder %s18, 1
      %p35 = por %p33, %p34
      %p36 = scmp.ne.s32.totalorder %s28, %s31
      %p37 = scmp.eq.s32.totalorder %s18, 0
      %p38 = por %p36, %p37
      %p39 = scmp.ne.s32.totalorder %s28, %s31
      %p40 = scmp.eq.s32.totalorder %s23, 1
      %p41 = por %p39, %p40
      %p42 = scmp.ne.s32.totalorder %s31, %s32
      %p43 = scmp.eq.s32.totalorder %s23, 0
      %p44 = por %p42, %p43
      %p45 = scmp.ne.s32.totalorder %s31, %s32
      %p46 = scmp.eq.s32.totalorder %s24, 1
      %p47 = por %p45, %p46
      %p49 = scmp.ne.s32.totalorder %s32, %s48
      %p50 = scmp.eq.s32.totalorder %s24, 0
      %p51 = por %p49, %p50
      %s53 = sadd.s32 %s52, 1
      %p56 = scmp.eq.s32.totalorder %s18, 1
      %p57 = scmp.ne.s32.totalorder %s52, %s54
      %p58 = scmp.eq.s32.totalorder %s18, 0
      %p59 = por %p57, %p58
      %p60 = scmp.ne.s32.totalorder %s52, %s54
      %p61 = scmp.eq.s32.totalorder %s23, 1
      %p62 = por %p60, %p61
      %p63 = scmp.ne.s32.totalorder %s54, %s55
      %p64 = scmp.eq.s32.totalorder %s23, 0
      %p65 = por %p63, %p64
      %p66 = scmp.ne.s32.totalorder %s54, %s55
      %p67 = scmp.eq.s32.totalorder %s24, 1
      %p68 = por %p66, %p67
      %p70 = scmp.ne.s32.totalorder %s55, %s69
      %p71 = scmp.eq.s32.totalorder %s24, 0
      %p72 = por %p70, %p71
      %s74 = sadd.s32 %s73, 1
      %p77 = scmp.eq.s32.totalorder %s18, 1
      %p78 = scmp.ne.s32.totalorder %s73, %s75
      %p79 = scmp.eq.s32.totalorder %s18, 0
      %p80 = por %p78, %p79
      %p81 = scmp.ne.s32.totalorder %s73, %s75
      %p82 = scmp.eq.s32.totalorder %s23, 1
      %p83 = por %p81, %p82
      %p84 = scmp.ne.s32.totalorder %s75, %s76
      %p85 = scmp.eq.s32.totalorder %s23, 0
      %p86 = por %p84, %p85
      %p87 = scmp.ne.s32.totalorder %s75, %s76
      %p88 = scmp.eq.s32.totalorder %s24, 1
      %p89 = por %p87, %p88
      %p91 = scmp.ne.s32.totalorder %s76, %s90
      %p92 = scmp.eq.s32.totalorder %s24, 0
      %p93 = por %p91, %p92
      %s95 = sadd.s32 %s94, 1
      %p98 = scmp.eq.s32.totalorder %s18, 1
      %p99 = scmp.ne.s32.totalorder %s94, %s96
      %p100 = scmp.eq.s32.totalorder %s18, 0
      %p101 = por %p99, %p100
      %p102 = scmp.ne.s32.totalorder %s94, %s96
      %p103 = scmp.eq.s32.totalorder %s23, 1
      %p104 = por %p102, %p103
      %p105 = scmp.ne.s32.totalorder %s96, %s97
      %p106 = scmp.eq.s32.totalorder %s23, 0
      %p107 = por %p105, %p106
      %p108 = scmp.ne.s32.totalorder %s96, %s97
      %p109 = scmp.eq.s32.totalorder %s24, 1
      %p110 = por %p108, %p109
      %p112 = scmp.ne.s32.totalorder %s97, %s111
      %p113 = scmp.eq.s32.totalorder %s24, 0
      %p114 = por %p112, %p113
      %s116 = sadd.s32 %s115, 1
      %p119 = scmp.eq.s32.totalorder %s18, 1
      %p120 = scmp.ne.s32.totalorder %s115, %s117
      %p121 = scmp.eq.s32.totalorder %s18, 0
      %p122 = por %p120, %p121
      %p123 = scmp.ne.s32.totalorder %s115, %s117
      %p124 = scmp.eq.s32.totalorder %s23, 1
      %p125 = por %p123, %p124
      %p126 = scmp.ne.s32.totalorder %s117, %s118
      %p127 = scmp.eq.s32.totalorder %s23, 0
      %p128 = por %p126, %p127
      %p129 = scmp.ne.s32.totalorder %s117, %s118
      %p130 = scmp.eq.s32.totalorder %s24, 1
      %p131 = por %p129, %p130
      %p133 = scmp.ne.s32.totalorder %s118, %s132
      %p134 = scmp.eq.s32.totalorder %s24, 0
      %p135 = por %p133, %p134
      %s137 = sadd.s32 %s136, 1
      %p140 = scmp.eq.s32.totalorder %s18, 1
      %p141 = scmp.ne.s32.totalorder %s136, %s138
      %p142 = scmp.eq.s32.totalorder %s18, 0
      %p143 = por %p141, %p142
      %p144 = scmp.ne.s32.totalorder %s136, %s138
      %p145 = scmp.eq.s32.totalorder %s23, 1
      %p146 = por %p144, %p145
      %p147 = scmp.ne.s32.totalorder %s138, %s139
      %p148 = scmp.eq.s32.totalorder %s23, 0
      %p149 = por %p147, %p148
      %p150 = scmp.ne.s32.totalorder %s138, %s139
      %p151 = scmp.eq.s32.totalorder %s24, 1
      %p152 = por %p150, %p151
      %p154 = scmp.ne.s32.totalorder %s139, %s153
      %p155 = scmp.eq.s32.totalorder %s24, 0
      %p156 = por %p154, %p155
      %s157 = ssub.s32 %s18, %s25
      %p158 = scmp.eq.s32.totalorder %s157, 0
      %s160 = sadd.s32 %s159, 1
      %s161 = scalar_select %p158, %s159, %s160
      %p164 = pneg %p158
      %p165 = scmp.eq.s32.totalorder %s18, 1
      %p166 = por %p164, %p165
      %p167 = scmp.ne.s32.totalorder %s159, %s162
      %p168 = scmp.eq.s32.totalorder %s18, 0
      %p169 = por %p167, %p168
      %p170 = scmp.ne.s32.totalorder %s159, %s162
      %p171 = scmp.eq.s32.totalorder %s23, 1
      %p172 = por %p170, %p171
      %p173 = scmp.ne.s32.totalorder %s162, %s163
      %p174 = scmp.eq.s32.totalorder %s23, 0
      %p175 = por %p173, %p174
      %p176 = scmp.ne.s32.totalorder %s162, %s163
      %p177 = scmp.eq.s32.totalorder %s24, 1
      %p178 = por %p176, %p177
      %p180 = scmp.ne.s32.totalorder %s163, %s179
      %p181 = scmp.eq.s32.totalorder %s24, 0
      %p182 = por %p180, %p181
      %p183 = scmp.le.s32.totalorder 1, %s18
      %p184 = scmp.lt.s32.totalorder %s18, 3
      %p185 = pnand %p183, %p184
      %p186 = pneg %p185
      // Predicated region
      $region9: #{tpu_custom_call.1} parent=5 // pred_check
        _
      $region10: #{tpu_custom_call.1} parent=5 // pred_check_branch
        %188 = sbr.rel (%p185) target = $region12
      $region11: #{tpu_custom_call.1} parent=5 // pred_region
        %s189 = ssub.s32 %s18, 1
        // Predicated region
        $region13: #{tpu_custom_call.1} parent=11 // pred_check
          %p190 = pneg %p65
        $region14: #{tpu_custom_call.1} parent=11 // pred_check_branch
          %192 = sbr.rel (%p190) target = $region16
        $region15: #{tpu_custom_call.1} parent=11 // pred_region
          _
        $region16: #{tpu_custom_call.1} parent=11 // pred_fallthru
          _
        // Predicated region
        $region17: #{tpu_custom_call.1} parent=11 // pred_check
          %p193 = pneg %p86
        $region18: #{tpu_custom_call.1} parent=11 // pred_check_branch
          %195 = sbr.rel (%p193) target = $region20
        $region19: #{tpu_custom_call.1} parent=11 // pred_region
          _
        $region20: #{tpu_custom_call.1} parent=11 // pred_fallthru
          _
        // Predicated region
        $region21: #{tpu_custom_call.1} parent=11 // pred_check
          %p196 = pneg %p107
        $region22: #{tpu_custom_call.1} parent=11 // pred_check_branch
          %198 = sbr.rel (%p196) target = $region24
        $region23: #{tpu_custom_call.1} parent=11 // pred_region
          _
        $region24: #{tpu_custom_call.1} parent=11 // pred_fallthru
          _
        // Predicated region
        $region25: #{tpu_custom_call.1} parent=11 // pred_check
          %p199 = pneg %p128
        $region26: #{tpu_custom_call.1} parent=11 // pred_check_branch
          %201 = sbr.rel (%p199) target = $region28
        $region27: #{tpu_custom_call.1} parent=11 // pred_region
          _
        $region28: #{tpu_custom_call.1} parent=11 // pred_fallthru
          _
        // Predicated region
        $region29: #{tpu_custom_call.1} parent=11 // pred_check
          %p202 = pneg %p149
        $region30: #{tpu_custom_call.1} parent=11 // pred_check_branch
          %204 = sbr.rel (%p202) target = $region32
        $region31: #{tpu_custom_call.1} parent=11 // pred_region
          _
        $region32: #{tpu_custom_call.1} parent=11 // pred_fallthru
          _
      $region12: #{tpu_custom_call.1} parent=5 // pred_fallthru
        _
      %p205 = scmp.lt.s32.totalorder %s18, 2
      // Predicated region
      $region33: #{tpu_custom_call.1} parent=5 // pred_check
        %p206 = pneg %p205
      $region34: #{tpu_custom_call.1} parent=5 // pred_check_branch
        %208 = sbr.rel (%p206) target = $region36
      $region35: #{tpu_custom_call.1} parent=5 // pred_region
        // Predicated region
        $region37: #{tpu_custom_call.1} parent=35 // pred_check
          %p209 = pneg %p38
        $region38: #{tpu_custom_call.1} parent=35 // pred_check_branch
          %211 = sbr.rel (%p209) target = $region40
        $region39: #{tpu_custom_call.1} parent=35 // pred_region
          %s212 = sand.u32 %s28, 1
          %s213 = scalar_lea.sflag [#allocation5], %s212
          %s214 = sand.u32 %s28, 1
          %s215 = smul.addr %s214, 12
          %s216 = scalar_lea.vmem [#allocation4], %s215
          %s218 = ssub.s32 192, 192
          %219 = vsyncadd %s213, %s218
          %s220 = smul.addr %s18, 3
          %s221 = smul.addr %s220, 64
          %s222 = scalar_lea.hbm %s0, %s221
          %s224 = sshll.u32 %s216, 4
          %s225 = int_to_ptr.vmem [resolvable:$true] %s224
          %227 = dma.hbm_to_vmem [thread:$0]  %s222, 192, %s225, %s213
        $region40: #{tpu_custom_call.1} parent=35 // pred_fallthru
          _
      $region36: #{tpu_custom_call.1} parent=5 // pred_fallthru
        _
      %p228 = scmp.le.s32.totalorder 1, %s18
      %p229 = scmp.lt.s32.totalorder %s18, 3
      %p230 = pnand %p228, %p229
      %p231 = pneg %p230
      // Predicated region
      $region41: #{tpu_custom_call.1} parent=5 // pred_check
        _
      $region42: #{tpu_custom_call.1} parent=5 // pred_check_branch
        %233 = sbr.rel (%p230) target = $region44
      $region43: #{tpu_custom_call.1} parent=5 // pred_region
        %s234 = ssub.s32 %s18, 1
        %s235 = sand.u32 %s31, 1
        %s236 = scalar_lea.sflag [#allocation5], %s235
        %s237 = sand.u32 %s31, 1
        %s238 = smul.addr %s237, 12
        %s239 = scalar_lea.vmem [#allocation4], %s238
        // Predicated region
        $region45: #{tpu_custom_call.1} parent=43 // pred_check
          %p240 = pneg %p44
        $region46: #{tpu_custom_call.1} parent=43 // pred_check_branch
          %242 = sbr.rel (%p240) target = $region48
        $region47: #{tpu_custom_call.1} parent=43 // pred_region
          %243 = dma.done %s236, 192
        $region48: #{tpu_custom_call.1} parent=43 // pred_fallthru
          _
        %s244 = sand.u32 %s31, 1
        %s245 = scalar_lea.sflag [#allocation5], %s244
        %s246 = sand.u32 %s31, 1
        %s247 = smul.addr %s246, 12
        %s248 = scalar_lea.vmem [#allocation4], %s247
        %p249 = pneg %p44
        %p250 = pneg %p41
        %p251 = pneg %p65
        %p252 = pneg %p62
        %p253 = pneg %p86
        %p254 = pneg %p83
        %p255 = pneg %p107
        %p256 = pneg %p104
        %p257 = pneg %p128
        %p258 = pneg %p125
        %p259 = pneg %p149
        %p260 = pneg %p146
        %p261 = pneg %p175
        %p262 = pneg %p172
        %s263 = sand.u32 %s162, 1
        %s264 = scalar_lea.sflag [#allocation6], %s263
        %s265 = sand.u32 %s162, 1
        %s266 = smul.addr %s265, 12
        %s267 = scalar_lea.vmem [#allocation7], %s266
        %268 = vst [vmem:[#allocation2] sm:$0xf] 0.0
        %vm269 = vcmask 1043712
        %vm270 = vcmask 261124
        %vm271 = vmor %vm270, %vm269
        %272 = vst.msk [vmem:[#allocation2 + $0xc] sm:$0xff] %vm271, 0.0
        %v273 = vld [vmem:[%s1] sm:$0xf]
        %v274 = vld [vmem:[%s3] sm:$0xf]
        %v275 = vld [vmem:[%s2] sm:$0xf]
        %v276 = vld [vmem:[%s4] sm:$0xf]
        %v277 = vld [vmem:[%s5] sm:$0x7]
        %v278 = vld [vmem:[%s239] sm:$0xff]
        %v279 = vld [vmem:[%s239 + $0x8] sm:$0xf]
        %v281 = vcombine.high %v278, %v278
        %283 = vst [vmem:[#allocation3] sm:$0xf] %v278
        %284 = vst [vmem:[#allocation3 + $0x8] sm:$0xf] %v281
        %vm285 = vcmask 257024
        %286 = vst.msk [vmem:[#allocation3 + $0x10] sm:$0xf] %vm285, %v279
        %v287 = vld [vmem:[%s239] sm:$0xff]
        %v288 = vld [vmem:[%s239 + $0x8] sm:$0xf]
        %v291 = vcombine.low %v287, %v287
        %v292 = vcombine.low %v288, %v288
        %293 = vrot.lane.b32.xlu0 %v291, 127
        %v294 = vpop.permute.xlu0 %293
        %295 = vrot.lane.b32.xlu0 %v287, 127
        %v296 = vpop.permute.xlu0 %295
        %297 = vrot.lane.b32.xlu0 %v292, 127
        %v298 = vpop.permute.xlu0 %297
        %vm299 = vcmask 1039360
        %v300 = vsel %vm299, %v294, %v296
        %v301 = vsel %vm299, %v296, %v298
        %305 = vst [vmem:[#allocation3] sm:$0xf0] %v300
        %306 = vst [vmem:[#allocation3 + $0x8] sm:$0xf0] %v301
        %307 = vst.msk [vmem:[#allocation3 + $0x10] sm:$0xf0] %vm270, %v298
        %v308 = vld [vmem:[%s239] sm:$0xff]
        %v309 = vld [vmem:[%s239 + $0x8] sm:$0xf]
        %v312 = vcombine.high %v308, %v308
        %313 = vrot.lane.b32.xlu0 %v308, 126
        %v314 = vpop.permute.xlu0 %313
        %315 = vrot.lane.b32.xlu0 %v312, 126
        %v316 = vpop.permute.xlu0 %315
        %317 = vrot.lane.b32.xlu0 %v309, 126
        %v318 = vpop.permute.xlu0 %317
        %vm319 = vcmask 1031168
        %v320 = vsel %vm319, %v314, %v316
        %v321 = vsel %vm319, %v316, %v318
        %325 = vst [vmem:[#allocation3 + $0x18] sm:$0xf] %v320
        %326 = vst [vmem:[#allocation3 + $0x20] sm:$0xf] %v321
        %327 = vst.msk [vmem:[#allocation3 + $0x28] sm:$0xf] %vm285, %v318
        %v328 = vld [vmem:[%s239] sm:$0xff]
        %v329 = vld [vmem:[%s239 + $0x8] sm:$0xf]
        %v332 = vcombine.low %v328, %v328
        %v333 = vcombine.low %v329, %v329
        %334 = vrot.lane.b32.xlu0 %v332, 110
        %v335 = vpop.permute.xlu0 %334
        %336 = vrot.lane.b32.xlu0 %v328, 110
        %v337 = vpop.permute.xlu0 %336
        %338 = vrot.lane.b32.xlu0 %v333, 110
        %v339 = vpop.permute.xlu0 %338
        %vm340 = vcmask 900096
        %v341 = vsel %vm340, %v335, %v337
        %v342 = vsel %vm340, %v337, %v339
        %346 = vst [vmem:[#allocation3 + $0x18] sm:$0xf0] %v341
        %347 = vst [vmem:[#allocation3 + $0x20] sm:$0xf0] %v342
        %348 = vst.msk [vmem:[#allocation3 + $0x28] sm:$0xf0] %vm270, %v339
        %v349 = vld [vmem:[%s239] sm:$0xff]
        %v350 = vld [vmem:[%s239 + $0x8] sm:$0xf]
        %v353 = vcombine.high %v349, %v349
        %354 = vrot.lane.b32.xlu0 %v349, 109
        %v355 = vpop.permute.xlu0 %354
        %356 = vrot.lane.b32.xlu0 %v353, 109
        %v357 = vpop.permute.xlu0 %356
        %358 = vrot.lane.b32.xlu0 %v350, 109
        %v359 = vpop.permute.xlu0 %358
        %vm360 = vcmask 891904
        %v361 = vsel %vm360, %v355, %v357
        %v362 = vsel %vm360, %v357, %v359
        %366 = vst [vmem:[#allocation3 + $0x30] sm:$0xf] %v361
        %367 = vst [vmem:[#allocation3 + $0x38] sm:$0xf] %v362
        %368 = vst.msk [vmem:[#allocation3 + $0x40] sm:$0xf] %vm285, %v359
        %v369 = vld [vmem:[%s239] sm:$0xff]
        %v370 = vld [vmem:[%s239 + $0x8] sm:$0xf]
        %v373 = vcombine.low %v369, %v369
        %v374 = vcombine.low %v370, %v370
        %375 = vrot.lane.b32.xlu0 %v373, 108
        %v376 = vpop.permute.xlu0 %375
        %377 = vrot.lane.b32.xlu0 %v369, 108
        %v378 = vpop.permute.xlu0 %377
        %379 = vrot.lane.b32.xlu0 %v374, 108
        %v380 = vpop.permute.xlu0 %379
        %vm381 = vcmask 883712
        %v382 = vsel %vm381, %v376, %v378
        %v383 = vsel %vm381, %v378, %v380
        %387 = vst [vmem:[#allocation3 + $0x30] sm:$0xf0] %v382
        %388 = vst [vmem:[#allocation3 + $0x38] sm:$0xf0] %v383
        %389 = vst.msk [vmem:[#allocation3 + $0x40] sm:$0xf0] %vm270, %v380
        %v390 = vld [vmem:[%s239] sm:$0xff]
        %v391 = vld [vmem:[%s239 + $0x8] sm:$0xf]
        %v394 = vcombine.high %v390, %v390
        %395 = vrot.lane.b32.xlu0 %v390, 92
        %v396 = vpop.permute.xlu0 %395
        %397 = vrot.lane.b32.xlu0 %v394, 92
        %v398 = vpop.permute.xlu0 %397
        %399 = vrot.lane.b32.xlu0 %v391, 92
        %v400 = vpop.permute.xlu0 %399
        %vm401 = vcmask 752640
        %v402 = vsel %vm401, %v396, %v398
        %v403 = vsel %vm401, %v398, %v400
        %407 = vst [vmem:[#allocation3 + $0x48] sm:$0xf] %v402
        %408 = vst [vmem:[#allocation3 + $0x50] sm:$0xf] %v403
        %409 = vst.msk [vmem:[#allocation3 + $0x58] sm:$0xf] %vm285, %v400
        %v410 = vld [vmem:[%s239] sm:$0xff]
        %v411 = vld [vmem:[%s239 + $0x8] sm:$0xf]
        %v414 = vcombine.low %v410, %v410
        %v415 = vcombine.low %v411, %v411
        %416 = vrot.lane.b32.xlu0 %v414, 91
        %v417 = vpop.permute.xlu0 %416
        %418 = vrot.lane.b32.xlu0 %v410, 91
        %v419 = vpop.permute.xlu0 %418
        %420 = vrot.lane.b32.xlu0 %v415, 91
        %v421 = vpop.permute.xlu0 %420
        %vm422 = vcmask 744448
        %v423 = vsel %vm422, %v417, %v419
        %v424 = vsel %vm422, %v419, %v421
        %428 = vst [vmem:[#allocation3 + $0x48] sm:$0xf0] %v423
        %429 = vst [vmem:[#allocation3 + $0x50] sm:$0xf0] %v424
        %430 = vst.msk [vmem:[#allocation3 + $0x58] sm:$0xf0] %vm270, %v421
        %v431 = vld [vmem:[%s239] sm:$0xff]
        %v432 = vld [vmem:[%s239 + $0x8] sm:$0xf]
        %v435 = vcombine.high %v431, %v431
        %436 = vrot.lane.b32.xlu0 %v431, 90
        %v437 = vpop.permute.xlu0 %436
        %438 = vrot.lane.b32.xlu0 %v435, 90
        %v439 = vpop.permute.xlu0 %438
        %440 = vrot.lane.b32.xlu0 %v432, 90
        %v441 = vpop.permute.xlu0 %440
        %vm442 = vcmask 736256
        %v443 = vsel %vm442, %v437, %v439
        %v444 = vsel %vm442, %v439, %v441
        %448 = vst [vmem:[#allocation3 + $0x60] sm:$0xf] %v443
        %449 = vst [vmem:[#allocation3 + $0x68] sm:$0xf] %v444
        %450 = vst.msk [vmem:[#allocation3 + $0x70] sm:$0xf] %vm285, %v441
        %v451 = vld [vmem:[#allocation3] sm:$0xff]
        %v452 = vld [vmem:[#allocation3 + $0x8] sm:$0xff]
        %v453 = vld [vmem:[#allocation3 + $0x10] sm:$0xff]
        %v454 = vld [vmem:[#allocation3 + $0x18] sm:$0xff]
        %v455 = vld [vmem:[#allocation3 + $0x20] sm:$0xff]
        %v456 = vld [vmem:[#allocation3 + $0x28] sm:$0xff]
        %v457 = vld [vmem:[#allocation3 + $0x30] sm:$0xff]
        %v458 = vld [vmem:[#allocation3 + $0x38] sm:$0xff]
        %v459 = vld [vmem:[#allocation3 + $0x40] sm:$0xff]
        %v460 = vld [vmem:[#allocation3 + $0x48] sm:$0xff]
        %v461 = vld [vmem:[#allocation3 + $0x50] sm:$0xff]
        %v462 = vld [vmem:[#allocation3 + $0x58] sm:$0xff]
        %v463 = vld [vmem:[#allocation3 + $0x60] sm:$0xf]
        %v464 = vld [vmem:[#allocation3 + $0x68] sm:$0xf]
        %v465 = vld [vmem:[#allocation3 + $0x70] sm:$0xf]
        %467 = vset.pattern.permute.xlu0 0
        %468 = vperm.xlu0 %467, %v275
        %v469 = vpop.permute.xlu0 %468
        %vm471 = vcmask 293888
        %v473 = vsel %vm471, %v273, 0
        %vm475 = vcmask 1043456
        %v477 = vsel %vm475, %v463, 0
        %v480 = vsel %vm475, %v464, 0
        %v483 = vsel %vm475, %v465, 0
        %485 = vmatprep.subr.mxu0 0.0
        %486 = vmatpush1.msra.mxu0 0.0
        %487 = vmatprep.subr.mxu0 0.0
        %488 = vmatpush1.msra.mxu0 0.0
        %489 = vmatprep.subr.mxu0 0.0
        %490 = vmatpush1.msra.mxu0 0.0
        %491 = vmatprep.subr.mxu0 0.0
        %492 = vmatpush1.msra.mxu0 0.0
        %493 = vmatprep.subr.mxu0 0.0
        %494 = vmatpush1.msra.mxu0 0.0
        %495 = vmatprep.subr.mxu0 0.0
        %496 = vmatpush1.msra.mxu0 0.0
        %497 = vmatprep.subr.mxu0 0.0
        %498 = vmatpush1.msra.mxu0 0.0
        %499 = vmatprep.subr.mxu0 0.0
        %500 = vmatpush1.msra.mxu0 0.0
        %501 = vmatprep.subr.mxu0 0.0
        %502 = vmatpush1.msra.mxu0 0.0
        %503 = vmatprep.subr.mxu0 0.0
        %504 = vmatpush1.msra.mxu0 0.0
        %505 = vmatprep.subr.mxu0 0.0
        %506 = vmatpush1.msra.mxu0 0.0
        %507 = vmatprep.subr.mxu0 %v480
        %508 = vmatpush1.msra.mxu0 %v477
        %509 = vmatprep.subr.mxu0 %v461
        %510 = vmatpush1.msra.mxu0 %v460
        %511 = vmatprep.subr.mxu0 %v458
        %512 = vmatpush1.msra.mxu0 %v457
        %513 = vmatprep.subr.mxu0 %v455
        %514 = vmatpush1.msra.mxu0 %v454
        %515 = vmatprep.subr.mxu0 %v452
        %516 = vmatpush1.msra.mxu0 %v451
        %517 = vmatprep.subr.mxu0 0.0
        %518 = vmatpush2.msra.mxu0 0.0
        %519 = vmatprep.subr.mxu0 0.0
        %520 = vmatpush2.msra.mxu0 0.0
        %521 = vmatprep.subr.mxu0 0.0
        %522 = vmatpush2.msra.mxu0 0.0
        %523 = vmatprep.subr.mxu0 0.0
        %524 = vmatpush2.msra.mxu0 0.0
        %525 = vmatprep.subr.mxu0 0.0
        %526 = vmatpush2.msra.mxu0 0.0
        %527 = vmatprep.subr.mxu0 0.0
        %528 = vmatpush2.msra.mxu0 0.0
        %529 = vmatprep.subr.mxu0 0.0
        %530 = vmatpush2.msra.mxu0 0.0
        %531 = vmatprep.subr.mxu0 0.0
        %532 = vmatpush2.msra.mxu0 0.0
        %533 = vmatprep.subr.mxu0 0.0
        %534 = vmatpush2.msra.mxu0 0.0
        %535 = vmatprep.subr.mxu0 0.0
        %536 = vmatpush2.msra.mxu0 0.0
        %537 = vmatprep.subr.mxu0 0.0
        %538 = vmatpush2.msra.mxu0 0.0
        %539 = vmatprep.subr.mxu0 0.0
        %540 = vmatpush2.msra.mxu0 0.0
        %541 = vmatprep.subr.mxu0 0.0
        %542 = vmatpush2.msra.mxu0 0.0
        %543 = vmatprep.subr.mxu0 0.0
        %544 = vmatpush2.msra.mxu0 0.0
        %545 = vmatprep.subr.mxu0 0.0
        %546 = vmatpush2.msra.mxu0 0.0
        %547 = vmatprep.subr.mxu0 0.0
        %548 = vmatpush2.msra.mxu0 0.0
        %549 = vmatprep.mubr.f32.mxu0 0.0
        %550 = vmatmul.mubr.f32.gmra.mxu0 %v473
        %v551 = vpop.f32.mrf.mxu0
        %v552 = vadd.f32 %v469, %v551
        %v553 = vpop.f32.mrf.mxu0
        %v554 = vadd.f32 %v469, %v553
        %555 = vdwg.mxu0
        %556 = vmatprep.subr.mxu0 0.0
        %557 = vmatpush1.msra.mxu0 0.0
        %558 = vmatprep.subr.mxu0 0.0
        %559 = vmatpush1.msra.mxu0 0.0
        %560 = vmatprep.subr.mxu0 0.0
        %561 = vmatpush1.msra.mxu0 0.0
        %562 = vmatprep.subr.mxu0 0.0
        %563 = vmatpush1.msra.mxu0 0.0
        %564 = vmatprep.subr.mxu0 0.0
        %565 = vmatpush1.msra.mxu0 0.0
        %566 = vmatprep.subr.mxu0 0.0
        %567 = vmatpush1.msra.mxu0 0.0
        %568 = vmatprep.subr.mxu0 0.0
        %569 = vmatpush1.msra.mxu0 0.0
        %570 = vmatprep.subr.mxu0 0.0
        %571 = vmatpush1.msra.mxu0 0.0
        %572 = vmatprep.subr.mxu0 0.0
        %573 = vmatpush1.msra.mxu0 0.0
        %574 = vmatprep.subr.mxu0 0.0
        %575 = vmatpush1.msra.mxu0 0.0
        %576 = vmatprep.subr.mxu0 0.0
        %577 = vmatpush1.msra.mxu0 0.0
        %578 = vmatprep.subr.mxu0 0.0
        %579 = vmatpush1.msra.mxu0 %v483
        %580 = vmatprep.subr.mxu0 0.0
        %581 = vmatpush1.msra.mxu0 %v462
        %582 = vmatprep.subr.mxu0 0.0
        %583 = vmatpush1.msra.mxu0 %v459
        %584 = vmatprep.subr.mxu0 0.0
        %585 = vmatpush1.msra.mxu0 %v456
        %586 = vmatprep.subr.mxu0 0.0
        %587 = vmatpush1.msra.mxu0 %v453
        %588 = vmatprep.subr.mxu0 0.0
        %589 = vmatpush2.msra.mxu0 0.0
        %590 = vmatprep.subr.mxu0 0.0
        %591 = vmatpush2.msra.mxu0 0.0
        %592 = vmatprep.subr.mxu0 0.0
        %593 = vmatpush2.msra.mxu0 0.0
        %594 = vmatprep.subr.mxu0 0.0
        %595 = vmatpush2.msra.mxu0 0.0
        %596 = vmatprep.subr.mxu0 0.0
        %597 = vmatpush2.msra.mxu0 0.0
        %598 = vmatprep.subr.mxu0 0.0
        %599 = vmatpush2.msra.mxu0 0.0
        %600 = vmatprep.subr.mxu0 0.0
        %601 = vmatpush2.msra.mxu0 0.0
        %602 = vmatprep.subr.mxu0 0.0
        %603 = vmatpush2.msra.mxu0 0.0
        %604 = vmatprep.subr.mxu0 0.0
        %605 = vmatpush2.msra.mxu0 0.0
        %606 = vmatprep.subr.mxu0 0.0
        %607 = vmatpush2.msra.mxu0 0.0
        %608 = vmatprep.subr.mxu0 0.0
        %609 = vmatpush2.msra.mxu0 0.0
        %610 = vmatprep.subr.mxu0 0.0
        %611 = vmatpush2.msra.mxu0 0.0
        %612 = vmatprep.subr.mxu0 0.0
        %613 = vmatpush2.msra.mxu0 0.0
        %614 = vmatprep.subr.mxu0 0.0
        %615 = vmatpush2.msra.mxu0 0.0
        %616 = vmatprep.subr.mxu0 0.0
        %617 = vmatpush2.msra.mxu0 0.0
        %618 = vmatprep.subr.mxu0 0.0
        %619 = vmatpush2.msra.mxu0 0.0
        %620 = vmatprep.mubr.f32.mxu0 0.0
        %621 = vmatmul.mubr.f32.gmra.mxu0 %v473
        %v622 = vpop.f32.mrf.mxu0
        %v623 = vadd.f32 %v469, %v622
        %v624 = vpop.f32.mrf.mxu0
        %625 = vdwg.mxu0
        %vm626 = vcmp.ge.f32.partialorder %v552, 1.0
        %vm627 = vcmp.ge.f32.partialorder %v554, 1.0
        %vm628 = vcmp.ge.f32.partialorder %v623, 1.0
        %v629 = vsel %vm626, 1, 0
        %v630 = vsel %vm627, 1, 0
        %v631 = vsel %vm628, 1, 0
        %v632 = vcvt.s32.f32 %v629
        %v633 = vcvt.s32.f32 %v630
        %v634 = vcvt.s32.f32 %v631
        %v636 = vlaneseq
        %v637 = vshrl.u32 %v636, 7
        %v638 = vsub.s32 0, %v637
        %v639 = vrot.slane %v277, %v638
        %v640 = vlaneseq
        %v641 = vshrl.u32 %v640, 7
        %v642 = vsub.s32 1, %v641
        %v643 = vrot.slane %v277, %v642
        %v644 = vlaneseq
        %v645 = vshrl.u32 %v644, 7
        %v646 = vsub.s32 2, %v645
        %v647 = vrot.slane %v277, %v646
        %v651 = vmul.f32 %v632, %v639
        %v652 = vmul.f32 %v633, %v643
        %v653 = vmul.f32 %v634, %v647
        %v656 = vcombine.low %v651, %v652
        %658 = vst [vmem:[#allocation2 + $0x4] sm:$0xff] %v656
        %659 = vst.msk [vmem:[#allocation2 + $0xc] sm:$0xf] %vm285, %v653
        %v660 = vld [vmem:[#allocation2] sm:$0xff]
        %v661 = vld [vmem:[#allocation2 + $0x8] sm:$0xff]
        %v664 = vcombine.high %v660, %v660
        %v665 = vcombine.high %v661, %v661
        %666 = vrot.lane.b32.xlu0 %v660, 19
        %v667 = vpop.permute.xlu0 %666
        %668 = vrot.lane.b32.xlu0 %v664, 19
        %v669 = vpop.permute.xlu0 %668
        %670 = vrot.lane.b32.xlu0 %v661, 19
        %v671 = vpop.permute.xlu0 %670
        %672 = vrot.lane.b32.xlu0 %v665, 19
        %v673 = vpop.permute.xlu0 %672
        %vm674 = vcmask 154624
        %v675 = vsel %vm674, %v667, %v669
        %v676 = vsel %vm674, %v669, %v671
        %v677 = vsel %vm674, %v671, %v673
        %681 = vst [vmem:[#allocation3] sm:$0xf] %v675
        %682 = vst [vmem:[#allocation3 + $0x8] sm:$0xf] %v676
        %683 = vst.msk [vmem:[#allocation3 + $0x10] sm:$0xf] %vm285, %v677
        %v684 = vld [vmem:[#allocation2] sm:$0xff]
        %v685 = vld [vmem:[#allocation2 + $0x8] sm:$0xff]
        %v688 = vcombine.low %v684, %v684
        %v689 = vcombine.low %v685, %v685
        %690 = vrot.lane.b32.xlu0 %v688, 18
        %v691 = vpop.permute.xlu0 %690
        %692 = vrot.lane.b32.xlu0 %v684, 18
        %v693 = vpop.permute.xlu0 %692
        %694 = vrot.lane.b32.xlu0 %v689, 18
        %v695 = vpop.permute.xlu0 %694
        %696 = vrot.lane.b32.xlu0 %v685, 18
        %v697 = vpop.permute.xlu0 %696
        %vm698 = vcmask 146432
        %v699 = vsel %vm698, %v691, %v693
        %v700 = vsel %vm698, %v693, %v695
        %v701 = vsel %vm698, %v695, %v697
        %705 = vst [vmem:[#allocation3] sm:$0xf0] %v699
        %706 = vst [vmem:[#allocation3 + $0x8] sm:$0xf0] %v700
        %707 = vst.msk [vmem:[#allocation3 + $0x10] sm:$0xf0] %vm270, %v701
        %v708 = vld [vmem:[#allocation2] sm:$0xff]
        %v709 = vld [vmem:[#allocation2 + $0x8] sm:$0xff]
        %v712 = vcombine.high %v708, %v708
        %v713 = vcombine.high %v709, %v709
        %714 = vrot.lane.b32.xlu0 %v708, 17
        %v715 = vpop.permute.xlu0 %714
        %716 = vrot.lane.b32.xlu0 %v712, 17
        %v717 = vpop.permute.xlu0 %716
        %718 = vrot.lane.b32.xlu0 %v709, 17
        %v719 = vpop.permute.xlu0 %718
        %720 = vrot.lane.b32.xlu0 %v713, 17
        %v721 = vpop.permute.xlu0 %720
        %vm722 = vcmask 138240
        %v723 = vsel %vm722, %v715, %v717
        %v724 = vsel %vm722, %v717, %v719
        %v725 = vsel %vm722, %v719, %v721
        %729 = vst [vmem:[#allocation3 + $0x18] sm:$0xf] %v723
        %730 = vst [vmem:[#allocation3 + $0x20] sm:$0xf] %v724
        %731 = vst.msk [vmem:[#allocation3 + $0x28] sm:$0xf] %vm285, %v725
        %v732 = vld [vmem:[#allocation2] sm:$0xff]
        %v733 = vld [vmem:[#allocation2 + $0x8] sm:$0xff]
        %v736 = vcombine.low %v732, %v732
        %v737 = vcombine.low %v733, %v733
        %738 = vrot.lane.b32.xlu0 %v736, 1
        %v739 = vpop.permute.xlu0 %738
        %740 = vrot.lane.b32.xlu0 %v732, 1
        %v741 = vpop.permute.xlu0 %740
        %742 = vrot.lane.b32.xlu0 %v737, 1
        %v743 = vpop.permute.xlu0 %742
        %744 = vrot.lane.b32.xlu0 %v733, 1
        %v745 = vpop.permute.xlu0 %744
        %vm746 = vcmask 7168
        %v747 = vsel %vm746, %v739, %v741
        %v748 = vsel %vm746, %v741, %v743
        %v749 = vsel %vm746, %v743, %v745
        %753 = vst [vmem:[#allocation3 + $0x18] sm:$0xf0] %v747
        %754 = vst [vmem:[#allocation3 + $0x20] sm:$0xf0] %v748
        %755 = vst.msk [vmem:[#allocation3 + $0x28] sm:$0xf0] %vm270, %v749
        %v756 = vld [vmem:[#allocation2 + $0x4] sm:$0xff]
        %v757 = vld [vmem:[#allocation2 + $0xc] sm:$0xf]
        %v759 = vcombine.high %v756, %v756
        %761 = vst [vmem:[#allocation3 + $0x30] sm:$0xf] %v756
        %762 = vst [vmem:[#allocation3 + $0x38] sm:$0xf] %v759
        %763 = vst.msk [vmem:[#allocation3 + $0x40] sm:$0xf] %vm285, %v757
        %v764 = vld [vmem:[#allocation2 + $0x4] sm:$0xff]
        %v765 = vld [vmem:[#allocation2 + $0xc] sm:$0xf]
        %v768 = vcombine.low %v764, %v764
        %v769 = vcombine.low %v765, %v765
        %770 = vrot.lane.b32.xlu0 %v768, 127
        %v771 = vpop.permute.xlu0 %770
        %772 = vrot.lane.b32.xlu0 %v764, 127
        %v773 = vpop.permute.xlu0 %772
        %774 = vrot.lane.b32.xlu0 %v769, 127
        %v775 = vpop.permute.xlu0 %774
        %v776 = vsel %vm299, %v771, %v773
        %v777 = vsel %vm299, %v773, %v775
        %781 = vst [vmem:[#allocation3 + $0x30] sm:$0xf0] %v776
        %782 = vst [vmem:[#allocation3 + $0x38] sm:$0xf0] %v777
        %783 = vst.msk [vmem:[#allocation3 + $0x40] sm:$0xf0] %vm270, %v775
        %v784 = vld [vmem:[#allocation2 + $0x4] sm:$0xff]
        %v785 = vld [vmem:[#allocation2 + $0xc] sm:$0xf]
        %v788 = vcombine.high %v784, %v784
        %789 = vrot.lane.b32.xlu0 %v784, 111
        %v790 = vpop.permute.xlu0 %789
        %791 = vrot.lane.b32.xlu0 %v788, 111
        %v792 = vpop.permute.xlu0 %791
        %793 = vrot.lane.b32.xlu0 %v785, 111
        %v794 = vpop.permute.xlu0 %793
        %vm795 = vcmask 908288
        %v796 = vsel %vm795, %v790, %v792
        %v797 = vsel %vm795, %v792, %v794
        %801 = vst [vmem:[#allocation3 + $0x48] sm:$0xf] %v796
        %802 = vst [vmem:[#allocation3 + $0x50] sm:$0xf] %v797
        %803 = vst.msk [vmem:[#allocation3 + $0x58] sm:$0xf] %vm285, %v794
        %v804 = vld [vmem:[#allocation2 + $0x4] sm:$0xff]
        %v805 = vld [vmem:[#allocation2 + $0xc] sm:$0xf]
        %v808 = vcombine.low %v804, %v804
        %v809 = vcombine.low %v805, %v805
        %810 = vrot.lane.b32.xlu0 %v808, 110
        %v811 = vpop.permute.xlu0 %810
        %812 = vrot.lane.b32.xlu0 %v804, 110
        %v813 = vpop.permute.xlu0 %812
        %814 = vrot.lane.b32.xlu0 %v809, 110
        %v815 = vpop.permute.xlu0 %814
        %v816 = vsel %vm340, %v811, %v813
        %v817 = vsel %vm340, %v813, %v815
        %821 = vst [vmem:[#allocation3 + $0x48] sm:$0xf0] %v816
        %822 = vst [vmem:[#allocation3 + $0x50] sm:$0xf0] %v817
        %823 = vst.msk [vmem:[#allocation3 + $0x58] sm:$0xf0] %vm270, %v815
        %v824 = vld [vmem:[#allocation2 + $0x4] sm:$0xff]
        %v825 = vld [vmem:[#allocation2 + $0xc] sm:$0xf]
        %v828 = vcombine.high %v824, %v824
        %829 = vrot.lane.b32.xlu0 %v824, 109
        %v830 = vpop.permute.xlu0 %829
        %831 = vrot.lane.b32.xlu0 %v828, 109
        %v832 = vpop.permute.xlu0 %831
        %833 = vrot.lane.b32.xlu0 %v825, 109
        %v834 = vpop.permute.xlu0 %833
        %v835 = vsel %vm360, %v830, %v832
        %v836 = vsel %vm360, %v832, %v834
        %840 = vst [vmem:[#allocation3 + $0x60] sm:$0xf] %v835
        %841 = vst [vmem:[#allocation3 + $0x68] sm:$0xf] %v836
        %842 = vst.msk [vmem:[#allocation3 + $0x70] sm:$0xf] %vm285, %v834
        %v843 = vld [vmem:[#allocation3] sm:$0xff]
        %v844 = vld [vmem:[#allocation3 + $0x8] sm:$0xff]
        %v845 = vld [vmem:[#allocation3 + $0x10] sm:$0xff]
        %v846 = vld [vmem:[#allocation3 + $0x18] sm:$0xff]
        %v847 = vld [vmem:[#allocation3 + $0x20] sm:$0xff]
        %v848 = vld [vmem:[#allocation3 + $0x28] sm:$0xff]
        %v849 = vld [vmem:[#allocation3 + $0x30] sm:$0xff]
        %v850 = vld [vmem:[#allocation3 + $0x38] sm:$0xff]
        %v851 = vld [vmem:[#allocation3 + $0x40] sm:$0xff]
        %v852 = vld [vmem:[#allocation3 + $0x48] sm:$0xff]
        %v853 = vld [vmem:[#allocation3 + $0x50] sm:$0xff]
        %v854 = vld [vmem:[#allocation3 + $0x58] sm:$0xff]
        %v855 = vld [vmem:[#allocation3 + $0x60] sm:$0xf]
        %v856 = vld [vmem:[#allocation3 + $0x68] sm:$0xf]
        %v857 = vld [vmem:[#allocation3 + $0x70] sm:$0xf]
        %859 = vset.pattern.permute.xlu0 0
        %860 = vperm.xlu0 %859, %v276
        %v861 = vpop.permute.xlu0 %860
        %v864 = vsel %vm471, %v274, 0
        %v867 = vsel %vm475, %v855, 0
        %v870 = vsel %vm475, %v856, 0
        %v873 = vsel %vm475, %v857, 0
        %875 = vmatprep.subr.mxu0 0.0
        %876 = vmatpush1.msra.mxu0 0.0
        %877 = vmatprep.subr.mxu0 0.0
        %878 = vmatpush1.msra.mxu0 0.0
        %879 = vmatprep.subr.mxu0 0.0
        %880 = vmatpush1.msra.mxu0 0.0
        %881 = vmatprep.subr.mxu0 0.0
        %882 = vmatpush1.msra.mxu0 0.0
        %883 = vmatprep.subr.mxu0 0.0
        %884 = vmatpush1.msra.mxu0 0.0
        %885 = vmatprep.subr.mxu0 0.0
        %886 = vmatpush1.msra.mxu0 0.0
        %887 = vmatprep.subr.mxu0 0.0
        %888 = vmatpush1.msra.mxu0 0.0
        %889 = vmatprep.subr.mxu0 0.0
        %890 = vmatpush1.msra.mxu0 0.0
        %891 = vmatprep.subr.mxu0 0.0
        %892 = vmatpush1.msra.mxu0 0.0
        %893 = vmatprep.subr.mxu0 0.0
        %894 = vmatpush1.msra.mxu0 0.0
        %895 = vmatprep.subr.mxu0 0.0
        %896 = vmatpush1.msra.mxu0 0.0
        %897 = vmatprep.subr.mxu0 %v870
        %898 = vmatpush1.msra.mxu0 %v867
        %899 = vmatprep.subr.mxu0 %v853
        %900 = vmatpush1.msra.mxu0 %v852
        %901 = vmatprep.subr.mxu0 %v850
        %902 = vmatpush1.msra.mxu0 %v849
        %903 = vmatprep.subr.mxu0 %v847
        %904 = vmatpush1.msra.mxu0 %v846
        %905 = vmatprep.subr.mxu0 %v844
        %906 = vmatpush1.msra.mxu0 %v843
        %907 = vmatprep.subr.mxu0 0.0
        %908 = vmatpush2.msra.mxu0 0.0
        %909 = vmatprep.subr.mxu0 0.0
        %910 = vmatpush2.msra.mxu0 0.0
        %911 = vmatprep.subr.mxu0 0.0
        %912 = vmatpush2.msra.mxu0 0.0
        %913 = vmatprep.subr.mxu0 0.0
        %914 = vmatpush2.msra.mxu0 0.0
        %915 = vmatprep.subr.mxu0 0.0
        %916 = vmatpush2.msra.mxu0 0.0
        %917 = vmatprep.subr.mxu0 0.0
        %918 = vmatpush2.msra.mxu0 0.0
        %919 = vmatprep.subr.mxu0 0.0
        %920 = vmatpush2.msra.mxu0 0.0
        %921 = vmatprep.subr.mxu0 0.0
        %922 = vmatpush2.msra.mxu0 0.0
        %923 = vmatprep.subr.mxu0 0.0
        %924 = vmatpush2.msra.mxu0 0.0
        %925 = vmatprep.subr.mxu0 0.0
        %926 = vmatpush2.msra.mxu0 0.0
        %927 = vmatprep.subr.mxu0 0.0
        %928 = vmatpush2.msra.mxu0 0.0
        %929 = vmatprep.subr.mxu0 0.0
        %930 = vmatpush2.msra.mxu0 0.0
        %931 = vmatprep.subr.mxu0 0.0
        %932 = vmatpush2.msra.mxu0 0.0
        %933 = vmatprep.subr.mxu0 0.0
        %934 = vmatpush2.msra.mxu0 0.0
        %935 = vmatprep.subr.mxu0 0.0
        %936 = vmatpush2.msra.mxu0 0.0
        %937 = vmatprep.subr.mxu0 0.0
        %938 = vmatpush2.msra.mxu0 0.0
        %939 = vmatprep.mubr.f32.mxu0 0.0
        %940 = vmatmul.mubr.f32.gmra.mxu0 %v864
        %v941 = vpop.f32.mrf.mxu0
        %v942 = vadd.f32 %v861, %v941
        %v943 = vpop.f32.mrf.mxu0
        %v944 = vadd.f32 %v861, %v943
        %945 = vdwg.mxu0
        %946 = vmatprep.subr.mxu0 0.0
        %947 = vmatpush1.msra.mxu0 0.0
        %948 = vmatprep.subr.mxu0 0.0
        %949 = vmatpush1.msra.mxu0 0.0
        %950 = vmatprep.subr.mxu0 0.0
        %951 = vmatpush1.msra.mxu0 0.0
        %952 = vmatprep.subr.mxu0 0.0
        %953 = vmatpush1.msra.mxu0 0.0
        %954 = vmatprep.subr.mxu0 0.0
        %955 = vmatpush1.msra.mxu0 0.0
        %956 = vmatprep.subr.mxu0 0.0
        %957 = vmatpush1.msra.mxu0 0.0
        %958 = vmatprep.subr.mxu0 0.0
        %959 = vmatpush1.msra.mxu0 0.0
        %960 = vmatprep.subr.mxu0 0.0
        %961 = vmatpush1.msra.mxu0 0.0
        %962 = vmatprep.subr.mxu0 0.0
        %963 = vmatpush1.msra.mxu0 0.0
        %964 = vmatprep.subr.mxu0 0.0
        %965 = vmatpush1.msra.mxu0 0.0
        %966 = vmatprep.subr.mxu0 0.0
        %967 = vmatpush1.msra.mxu0 0.0
        %968 = vmatprep.subr.mxu0 0.0
        %969 = vmatpush1.msra.mxu0 %v873
        %970 = vmatprep.subr.mxu0 0.0
        %971 = vmatpush1.msra.mxu0 %v854
        %972 = vmatprep.subr.mxu0 0.0
        %973 = vmatpush1.msra.mxu0 %v851
        %974 = vmatprep.subr.mxu0 0.0
        %975 = vmatpush1.msra.mxu0 %v848
        %976 = vmatprep.subr.mxu0 0.0
        %977 = vmatpush1.msra.mxu0 %v845
        %978 = vmatprep.subr.mxu0 0.0
        %979 = vmatpush2.msra.mxu0 0.0
        %980 = vmatprep.subr.mxu0 0.0
        %981 = vmatpush2.msra.mxu0 0.0
        %982 = vmatprep.subr.mxu0 0.0
        %983 = vmatpush2.msra.mxu0 0.0
        %984 = vmatprep.subr.mxu0 0.0
        %985 = vmatpush2.msra.mxu0 0.0
        %986 = vmatprep.subr.mxu0 0.0
        %987 = vmatpush2.msra.mxu0 0.0
        %988 = vmatprep.subr.mxu0 0.0
        %989 = vmatpush2.msra.mxu0 0.0
        %990 = vmatprep.subr.mxu0 0.0
        %991 = vmatpush2.msra.mxu0 0.0
        %992 = vmatprep.subr.mxu0 0.0
        %993 = vmatpush2.msra.mxu0 0.0
        %994 = vmatprep.subr.mxu0 0.0
        %995 = vmatpush2.msra.mxu0 0.0
        %996 = vmatprep.subr.mxu0 0.0
        %997 = vmatpush2.msra.mxu0 0.0
        %998 = vmatprep.subr.mxu0 0.0
        %999 = vmatpush2.msra.mxu0 0.0
        %1000 = vmatprep.subr.mxu0 0.0
        %1001 = vmatpush2.msra.mxu0 0.0
        %1002 = vmatprep.subr.mxu0 0.0
        %1003 = vmatpush2.msra.mxu0 0.0
        %1004 = vmatprep.subr.mxu0 0.0
        %1005 = vmatpush2.msra.mxu0 0.0
        %1006 = vmatprep.subr.mxu0 0.0
        %1007 = vmatpush2.msra.mxu0 0.0
        %1008 = vmatprep.subr.mxu0 0.0
        %1009 = vmatpush2.msra.mxu0 0.0
        %1010 = vmatprep.mubr.f32.mxu0 0.0
        %1011 = vmatmul.mubr.f32.gmra.mxu0 %v864
        %v1012 = vpop.f32.mrf.mxu0
        %v1013 = vadd.f32 %v861, %v1012
        %v1014 = vpop.f32.mrf.mxu0
        %1015 = vdwg.mxu0
        %vm1016 = vcmp.ge.f32.partialorder %v942, 1.0
        %vm1017 = vcmp.ge.f32.partialorder %v944, 1.0
        %vm1018 = vcmp.ge.f32.partialorder %v1013, 1.0
        %v1019 = vsel %vm1016, 1, 0
        %v1020 = vsel %vm1017, 1, 0
        %v1021 = vsel %vm1018, 1, 0
        %v1022 = vcvt.s32.f32 %v1019
        %v1023 = vcvt.s32.f32 %v1020
        %v1024 = vcvt.s32.f32 %v1021
        %v1025 = vld [vmem:[%s239] sm:$0xff]
        %v1026 = vld [vmem:[%s239 + $0x8] sm:$0xf]
        %v1029 = vcombine.high %v1025, %v1025
        %1030 = vrot.lane.b32.xlu0 %v1025, 109
        %v1031 = vpop.permute.xlu0 %1030
        %1032 = vrot.lane.b32.xlu0 %v1029, 109
        %v1033 = vpop.permute.xlu0 %1032
        %1034 = vrot.lane.b32.xlu0 %v1026, 109
        %v1035 = vpop.permute.xlu0 %1034
        %v1036 = vsel %vm360, %v1031, %v1033
        %v1037 = vsel %vm360, %v1033, %v1035
        %v1041 = vadd.f32 %v1022, %v1036
        %v1042 = vadd.f32 %v1023, %v1037
        %v1043 = vadd.f32 %v1024, %v1035
        %v1046 = vcombine.low %v1041, %v1042
        %1048 = vst [vmem:[%s267] sm:$0xff] %v1046
        %1049 = vst.msk [vmem:[%s267 + $0x8] sm:$0xf] %vm285, %v1043
        %s1050 = sand.u32 %s162, 1
        %s1051 = scalar_lea.sflag [#allocation6], %s1050
        %s1052 = sand.u32 %s162, 1
        %s1053 = smul.addr %s1052, 12
        %s1054 = scalar_lea.vmem [#allocation7], %s1053
        // Predicated region
        $region49: #{tpu_custom_call.1} parent=43 // pred_check
          %p1055 = pneg %p172
        $region50: #{tpu_custom_call.1} parent=43 // pred_check_branch
          %1057 = sbr.rel (%p1055) target = $region52
        $region51: #{tpu_custom_call.1} parent=43 // pred_region
          %s1059 = ssub.s32 192, 192
          %1060 = vsyncadd %s1051, %s1059
          %s1061 = smul.addr %s23, 3
          %s1062 = smul.addr %s1061, 64
          %s1063 = scalar_lea.hbm %s6, %s1062
          %s1065 = sshll.u32 %s1054, 4
          %s1066 = int_to_ptr.vmem [resolvable:$true] %s1065
          %1068 = dma.vmem_to_hbm [thread:$0]  %s1066, 192, %s1063, %s1051
        $region52: #{tpu_custom_call.1} parent=43 // pred_fallthru
          _
      $region44: #{tpu_custom_call.1} parent=5 // pred_fallthru
        _
      %p1069 = scmp.le.s32.totalorder 2, %s18
      // Predicated region
      $region53: #{tpu_custom_call.1} parent=5 // pred_check
        %p1070 = pneg %p1069
      $region54: #{tpu_custom_call.1} parent=5 // pred_check_branch
        %1072 = sbr.rel (%p1070) target = $region56
      $region55: #{tpu_custom_call.1} parent=5 // pred_region
        %s1073 = ssub.s32 %s18, 2
        // Predicated region
        $region57: #{tpu_custom_call.1} parent=55 // pred_check
          %p1074 = pneg %p178
        $region58: #{tpu_custom_call.1} parent=55 // pred_check_branch
          %1076 = sbr.rel (%p1074) target = $region60
        $region59: #{tpu_custom_call.1} parent=55 // pred_region
          %s1077 = sand.u32 %s163, 1
          %s1078 = scalar_lea.sflag [#allocation6], %s1077
          %s1079 = sand.u32 %s163, 1
          %s1080 = smul.addr %s1079, 12
          %s1081 = scalar_lea.vmem [#allocation7], %s1080
          %1082 = dma.done %s1078, 192
        $region60: #{tpu_custom_call.1} parent=55 // pred_fallthru
          _
      $region56: #{tpu_custom_call.1} parent=5 // pred_fallthru
        _
    $region6: #{tpu_custom_call.1} parent=1 // loop_footer
      %s22 = sadd.s32 1, %s18
    $region7: #{tpu_custom_call.1} parent=1 // loop_footer_branch
      %17 = sbr.rel target = $region3
    $region8: #{tpu_custom_call.1} parent=1 // loop_exit
      _
    %1083 = vsyncpa [#allocation5], 1
    %s1084 = scalar_lea.sflag [#allocation5], 1
    %1085 = vsyncpa %s1084, 1
    %1086 = vsyncpa [#allocation6], 1
    %s1087 = scalar_lea.sflag [#allocation6], 1
    %1088 = vsyncpa %s1087, 1

</llo_original>
